<compile_context>
chip_gen: v7x
topology: tpu7x:2x2x1
jax: 0.10.0
libtpu: 0.0.40
codegen_flags: <defaults>
</compile_context>

<pallas_src>
import functools

import numpy as np

import jax
import jax.numpy as jnp
from jax.experimental import pallas as pl
from jax.experimental.pallas import tpu as pltpu


def _round_up(x, m):
    return ((x + m - 1) // m) * m


def _detect_tpu():
    """Returns (tensorcores_per_chip, prefer_bf16) from the device kind."""
    kind = ""
    try:
        kind = jax.devices()[0].device_kind.lower()
    except Exception:
        pass
    is_v7 = ("v7" in kind) or ("tpu7" in kind) or ("7x" in kind)
    is_v6 = "v6" in kind
    num_cores = 2 if is_v7 else 1          # v7x: 2 TensorCores per chip
    prefer_bf16 = is_v6 or is_v7           # native bf16 MXU path on v6e/v7x
    return num_cores, prefer_bf16


def _conv3x3_relu_kernel(x_ref, w_ref, b_ref, ml_ref, mr_ref, o_ref,
                         *, W, KH, KW, PAD):
    # x_ref : (bn, Cin, H*W)     unpadded, channels on sublanes, H*W on lanes
    # w_ref : (Cout, KH*KW*Cin)  tap-major / channel-minor
    # b_ref : (Cout, 1)          f32 bias
    # ml_ref: (1, LP)            0 where input col == W-1  (used by dw=-1 taps)
    # mr_ref: (1, LP)            0 where input col == 0    (used by dw=+1 taps)
    # o_ref : (bn, Cout, H*W)    lane-dense output
    bn, Cin, HW = x_ref.shape

    # In-kernel zero padding of the flattened lane axis.  PAD is a multiple of
    # 128, so this is an aligned lane concatenation (no wrapper jnp.pad, no
    # extra HBM round trip).  Row-edge validity falls out of these zeros.
    x = x_ref[...]
    zpad = jnp.zeros((bn, Cin, PAD), x.dtype)
    xp = jnp.concatenate([zpad, x, zpad], axis=-1)          # (bn, Cin, LP)

    # Column-edge premasking: two full-block multiplies instead of six
    # per-image mask multiplies inside the tap loop.
    x_l = xp * ml_ref[...]                                  # source for dw=-1
    x_r = xp * mr_ref[...]                                  # source for dw=+1
    srcs = {-1: x_l, 0: xp, 1: x_r}

    # im2col in registers: rows are tap-major / channel-minor, lanes are
    # image-major (each image's HW block is a 128-aligned lane slab).
    rows = []
    for kh in range(KH):
        for kw in range(KW):
            dh, dw = kh - KH // 2, kw - KW // 2
            s = PAD + dh * W + dw                           # static lane offset
            tap = srcs[dw][:, :, s:s + HW]                  # (bn, Cin, HW)
            if bn == 1:
                rows.append(tap[0])
            else:
                rows.append(jnp.concatenate([tap[i] for i in range(bn)],
                                            axis=-1))       # (Cin, bn*HW)
    im = jnp.concatenate(rows, axis=0)                      # (KH*KW*Cin, bn*HW)

    # ONE fat MXU contraction per grid step: (Cout, 36) x (36, bn*HW).
    acc = jax.lax.dot_general(
        w_ref[...], im,
        dimension_numbers=(((1,), (0,)), ((), ())),
        preferred_element_type=jnp.float32)                 # (Cout, bn*HW) f32

    out = jnp.maximum(acc + b_ref[...], 0.0).astype(o_ref.dtype)

    for i in range(bn):                                     # aligned lane slices
        o_ref[i] = out[:, i * HW:(i + 1) * HW]


def m_conv_forward(x_nchw, w_oihw, bias, *, batch_block=None, compute_dtype=None):
    """Conv2d(kernel=3, stride=1, padding=1) + ReLU, matching M_Conv.forward."""
    N, Cin, H, W = x_nchw.shape
    Cout, Cin_w, KH, KW = w_oihw.shape
    assert Cin_w == Cin
    assert KH == 3 and KW == 3, "kernel specialised for 3x3, stride=1, padding=1"
    HW = H * W
    assert HW % 128 == 0, "H*W must be a multiple of 128 for the lane-dense layout"

    num_cores, prefer_bf16 = _detect_tpu()
    if compute_dtype is None:
        # bf16 MXU inputs (f32 accumulation) on v6e/v7x; keep f32 on v5e.
        compute_dtype = jnp.bfloat16 if prefer_bf16 else x_nchw.dtype

    # Lane padding is done in-kernel; keep it 128-aligned and >= W+1.
    PAD = _round_up(W * (KH // 2) + (KW // 2), 128)
    LP = HW + 2 * PAD

    # Input stays NCHW: channels on sublanes, flattened H*W on lanes (free reshape).
    x_flat = x_nchw.reshape(N, Cin, HW).astype(compute_dtype)

    # OIHW -> (Cout, KH*KW*Cin), tap-major / channel-minor (matches im2col order).
    w2d = jnp.transpose(w_oihw, (0, 2, 3, 1)).reshape(Cout, KH * KW * Cin)
    w2d = w2d.astype(compute_dtype)
    b2d = bias.reshape(Cout, 1).astype(jnp.float32)

    # Column-edge validity masks over the PADDED lane axis (host constants):
    # dw=-1 taps must never see an element from input column W-1,
    # dw=+1 taps must never see an element from input column 0.
    col = (np.arange(LP) - PAD) % W
    mask_l = jnp.asarray(col != W - 1, dtype=compute_dtype).reshape(1, LP)
    mask_r = jnp.asarray(col != 0, dtype=compute_dtype).reshape(1, LP)

    if batch_block is None:
        # Single grid step on single-TC chips (v5e/v6e): this kernel is
        # fixed-overhead bound, so extra steps only add launch/DMA setup.
        # On v7x split the batch across the 2 TensorCores.
        if num_cores > 1 and N > 1 and N % num_cores == 0:
            batch_block = N // num_cores
        else:
            batch_block = N
    assert N % batch_block == 0
    grid = (N // batch_block,)

    kernel = functools.partial(_conv3x3_relu_kernel, W=W, KH=KH, KW=KW, PAD=PAD)

    out_flat = pl.pallas_call(
        kernel,
        out_shape=jax.ShapeDtypeStruct((N, Cout, HW), x_nchw.dtype),
        grid_spec=pltpu.PrefetchScalarGridSpec(
            num_scalar_prefetch=0,
            grid=grid,
            in_specs=[
                pl.BlockSpec((batch_block, Cin, HW), lambda i: (i, 0, 0)),
                pl.BlockSpec((Cout, KH * KW * Cin), lambda i: (0, 0)),
                pl.BlockSpec((Cout, 1), lambda i: (0, 0)),
                pl.BlockSpec((1, LP), lambda i: (0, 0)),
                pl.BlockSpec((1, LP), lambda i: (0, 0)),
            ],
            out_specs=pl.BlockSpec((batch_block, Cout, HW), lambda i: (i, 0, 0)),
        ),
        compiler_params=pltpu.CompilerParams(
            dimension_semantics=("parallel",),
        ),
    )(x_flat, w2d, b2d, mask_l, mask_r)

    # (N, Cout, H*W) -> (N, Cout, H, W): free reshape, output already NCHW.
    return out_flat.reshape(N, Cout, H, W)


def _reference(x_nchw, w_oihw, bias):
    out = jax.lax.conv_general_dilated(
        x_nchw, w_oihw,
        window_strides=(1, 1),
        padding=((1, 1), (1, 1)),
        dimension_numbers=("NCHW", "OIHW", "NCHW"),
    )
    out = out + bias.reshape(1, -1, 1, 1)
    return jnp.maximum(out, 0.0)


if __name__ == "__main__":
    # Small shapes consistent with M_Conv(input_channels=4, output_channels=8).
    N, Cin, H, W = 2, 4, 16, 16
    Cout, K = 8, 3

    key = jax.random.PRNGKey(0)
    kx, kw, kb = jax.random.split(key, 3)

    x = jax.random.normal(kx, (N, Cin, H, W), dtype=jnp.float32)

    # Deterministic Conv2d-style init: uniform(-bound, bound), bound = 1/sqrt(fan_in).
    fan_in = Cin * K * K
    bound = 1.0 / (fan_in ** 0.5)
    w = jax.random.uniform(kw, (Cout, Cin, K, K), minval=-bound, maxval=bound,
                           dtype=jnp.float32)
    b = jax.random.uniform(kb, (Cout,), minval=-bound, maxval=bound,
                           dtype=jnp.float32)

    out = m_conv_forward(x, w, b)
    out = jax.block_until_ready(out)
    assert out.shape == (N, Cout, H, W)

    # Reference uses inputs cast to the kernel's compute dtype (exact in f32;
    # for the bf16 path this removes the input-quantization difference so the
    # comparison stays tight while still catching any layout/mask bug).
    _, prefer_bf16 = _detect_tpu()
    cd = jnp.bfloat16 if prefer_bf16 else jnp.float32
    ref = _reference(x.astype(cd).astype(jnp.float32),
                     w.astype(cd).astype(jnp.float32), b)
    assert jnp.allclose(out, ref, atol=2e-4, rtol=2e-4), "mismatch vs reference conv"

    print("KERNEL_OK")
</pallas_src>

<mosaic_0001>
module attributes {stable_mosaic.version = 11 : i64} {
  func.func @_conv3x3_relu_kernel(%arg0: i32, %arg1: memref<2x4x256xf32, #tpu.memory_space<vmem>>, %arg2: memref<8x36xf32, #tpu.memory_space<vmem>>, %arg3: memref<8x1xf32, #tpu.memory_space<vmem>>, %arg4: memref<1x512xf32, #tpu.memory_space<vmem>>, %arg5: memref<1x512xf32, #tpu.memory_space<vmem>>, %arg6: memref<2x8x256xf32, #tpu.memory_space<vmem>>) attributes {dimension_semantics = [#tpu.dimension_semantics<parallel>], iteration_bounds = array<i64: 1>, scalar_prefetch = 0 : i64, scratch_operands = 0 : i64, tpu.core_type = #tpu.core_type<tc>, window_params = [{transform_indices = @transform_0, window_bounds = array<i64: 2, 4, 256>}, {pipeline_mode = #tpu.pipeline_mode<synchronous>, transform_indices = @transform_1, window_bounds = array<i64: 8, 36>}, {pipeline_mode = #tpu.pipeline_mode<synchronous>, transform_indices = @transform_2, window_bounds = array<i64: 8, 1>}, {pipeline_mode = #tpu.pipeline_mode<synchronous>, transform_indices = @transform_3, window_bounds = array<i64: 1, 512>}, {pipeline_mode = #tpu.pipeline_mode<synchronous>, transform_indices = @transform_4, window_bounds = array<i64: 1, 512>}, {transform_indices = @transform_5, window_bounds = array<i64: 2, 8, 256>}]} {
    %c0 = arith.constant 0 : index
    %c0_0 = arith.constant 0 : index
    %c0_1 = arith.constant 0 : index
    %0 = vector.load %arg1[%c0, %c0_0, %c0_1] : memref<2x4x256xf32, #tpu.memory_space<vmem>>, vector<2x4x256xf32>
    %cst = arith.constant 0.000000e+00 : f32
    %1 = vector.broadcast %cst : f32 to vector<2x4x128xf32>
    %2 = tpu.concatenate %1, %0, %1 in 2 : vector<2x4x128xf32>, vector<2x4x256xf32>, vector<2x4x128xf32> -> vector<2x4x512xf32>
    %c0_2 = arith.constant 0 : index
    %c0_3 = arith.constant 0 : index
    %3 = vector.load %arg4[%c0_2, %c0_3] : memref<1x512xf32, #tpu.memory_space<vmem>>, vector<1x512xf32>
    %4 = vector.shape_cast %3 : vector<1x512xf32> to vector<1x1x512xf32>
    %5 = vector.broadcast %4 : vector<1x1x512xf32> to vector<2x4x512xf32>
    %6 = arith.mulf %2, %5 : vector<2x4x512xf32>
    %c0_4 = arith.constant 0 : index
    %c0_5 = arith.constant 0 : index
    %7 = vector.load %arg5[%c0_4, %c0_5] : memref<1x512xf32, #tpu.memory_space<vmem>>, vector<1x512xf32>
    %8 = vector.shape_cast %7 : vector<1x512xf32> to vector<1x1x512xf32>
    %9 = vector.broadcast %8 : vector<1x1x512xf32> to vector<2x4x512xf32>
    %10 = arith.mulf %2, %9 : vector<2x4x512xf32>
    %11 = vector.extract_strided_slice %6 {offsets = [0, 0, 111], sizes = [2, 4, 256], strides = [1, 1, 1]} : vector<2x4x512xf32> to vector<2x4x256xf32>
    %12 = vector.extract_strided_slice %11 {offsets = [0, 0, 0], sizes = [1, 4, 256], strides = [1, 1, 1]} : vector<2x4x256xf32> to vector<1x4x256xf32>
    %13 = vector.shape_cast %12 : vector<1x4x256xf32> to vector<4x256xf32>
    %14 = vector.extract_strided_slice %11 {offsets = [1, 0, 0], sizes = [1, 4, 256], strides = [1, 1, 1]} : vector<2x4x256xf32> to vector<1x4x256xf32>
    %15 = vector.shape_cast %14 : vector<1x4x256xf32> to vector<4x256xf32>
    %16 = tpu.concatenate %13, %15 in 1 : vector<4x256xf32>, vector<4x256xf32> -> vector<4x512xf32>
    %17 = vector.extract_strided_slice %2 {offsets = [0, 0, 112], sizes = [2, 4, 256], strides = [1, 1, 1]} : vector<2x4x512xf32> to vector<2x4x256xf32>
    %18 = vector.extract_strided_slice %17 {offsets = [0, 0, 0], sizes = [1, 4, 256], strides = [1, 1, 1]} : vector<2x4x256xf32> to vector<1x4x256xf32>
    %19 = vector.shape_cast %18 : vector<1x4x256xf32> to vector<4x256xf32>
    %20 = vector.extract_strided_slice %17 {offsets = [1, 0, 0], sizes = [1, 4, 256], strides = [1, 1, 1]} : vector<2x4x256xf32> to vector<1x4x256xf32>
    %21 = vector.shape_cast %20 : vector<1x4x256xf32> to vector<4x256xf32>
    %22 = tpu.concatenate %19, %21 in 1 : vector<4x256xf32>, vector<4x256xf32> -> vector<4x512xf32>
    %23 = vector.extract_strided_slice %10 {offsets = [0, 0, 113], sizes = [2, 4, 256], strides = [1, 1, 1]} : vector<2x4x512xf32> to vector<2x4x256xf32>
    %24 = vector.extract_strided_slice %23 {offsets = [0, 0, 0], sizes = [1, 4, 256], strides = [1, 1, 1]} : vector<2x4x256xf32> to vector<1x4x256xf32>
    %25 = vector.shape_cast %24 : vector<1x4x256xf32> to vector<4x256xf32>
    %26 = vector.extract_strided_slice %23 {offsets = [1, 0, 0], sizes = [1, 4, 256], strides = [1, 1, 1]} : vector<2x4x256xf32> to vector<1x4x256xf32>
    %27 = vector.shape_cast %26 : vector<1x4x256xf32> to vector<4x256xf32>
    %28 = tpu.concatenate %25, %27 in 1 : vector<4x256xf32>, vector<4x256xf32> -> vector<4x512xf32>
    %29 = vector.extract_strided_slice %6 {offsets = [0, 0, 127], sizes = [2, 4, 256], strides = [1, 1, 1]} : vector<2x4x512xf32> to vector<2x4x256xf32>
    %30 = vector.extract_strided_slice %29 {offsets = [0, 0, 0], sizes = [1, 4, 256], strides = [1, 1, 1]} : vector<2x4x256xf32> to vector<1x4x256xf32>
    %31 = vector.shape_cast %30 : vector<1x4x256xf32> to vector<4x256xf32>
    %32 = vector.extract_strided_slice %29 {offsets = [1, 0, 0], sizes = [1, 4, 256], strides = [1, 1, 1]} : vector<2x4x256xf32> to vector<1x4x256xf32>
    %33 = vector.shape_cast %32 : vector<1x4x256xf32> to vector<4x256xf32>
    %34 = tpu.concatenate %31, %33 in 1 : vector<4x256xf32>, vector<4x256xf32> -> vector<4x512xf32>
    %35 = vector.extract_strided_slice %2 {offsets = [0, 0, 128], sizes = [2, 4, 256], strides = [1, 1, 1]} : vector<2x4x512xf32> to vector<2x4x256xf32>
    %36 = vector.extract_strided_slice %35 {offsets = [0, 0, 0], sizes = [1, 4, 256], strides = [1, 1, 1]} : vector<2x4x256xf32> to vector<1x4x256xf32>
    %37 = vector.shape_cast %36 : vector<1x4x256xf32> to vector<4x256xf32>
    %38 = vector.extract_strided_slice %35 {offsets = [1, 0, 0], sizes = [1, 4, 256], strides = [1, 1, 1]} : vector<2x4x256xf32> to vector<1x4x256xf32>
    %39 = vector.shape_cast %38 : vector<1x4x256xf32> to vector<4x256xf32>
    %40 = tpu.concatenate %37, %39 in 1 : vector<4x256xf32>, vector<4x256xf32> -> vector<4x512xf32>
    %41 = vector.extract_strided_slice %10 {offsets = [0, 0, 129], sizes = [2, 4, 256], strides = [1, 1, 1]} : vector<2x4x512xf32> to vector<2x4x256xf32>
    %42 = vector.extract_strided_slice %41 {offsets = [0, 0, 0], sizes = [1, 4, 256], strides = [1, 1, 1]} : vector<2x4x256xf32> to vector<1x4x256xf32>
    %43 = vector.shape_cast %42 : vector<1x4x256xf32> to vector<4x256xf32>
    %44 = vector.extract_strided_slice %41 {offsets = [1, 0, 0], sizes = [1, 4, 256], strides = [1, 1, 1]} : vector<2x4x256xf32> to vector<1x4x256xf32>
    %45 = vector.shape_cast %44 : vector<1x4x256xf32> to vector<4x256xf32>
    %46 = tpu.concatenate %43, %45 in 1 : vector<4x256xf32>, vector<4x256xf32> -> vector<4x512xf32>
    %47 = vector.extract_strided_slice %6 {offsets = [0, 0, 143], sizes = [2, 4, 256], strides = [1, 1, 1]} : vector<2x4x512xf32> to vector<2x4x256xf32>
    %48 = vector.extract_strided_slice %47 {offsets = [0, 0, 0], sizes = [1, 4, 256], strides = [1, 1, 1]} : vector<2x4x256xf32> to vector<1x4x256xf32>
    %49 = vector.shape_cast %48 : vector<1x4x256xf32> to vector<4x256xf32>
    %50 = vector.extract_strided_slice %47 {offsets = [1, 0, 0], sizes = [1, 4, 256], strides = [1, 1, 1]} : vector<2x4x256xf32> to vector<1x4x256xf32>
    %51 = vector.shape_cast %50 : vector<1x4x256xf32> to vector<4x256xf32>
    %52 = tpu.concatenate %49, %51 in 1 : vector<4x256xf32>, vector<4x256xf32> -> vector<4x512xf32>
    %53 = vector.extract_strided_slice %2 {offsets = [0, 0, 144], sizes = [2, 4, 256], strides = [1, 1, 1]} : vector<2x4x512xf32> to vector<2x4x256xf32>
    %54 = vector.extract_strided_slice %53 {offsets = [0, 0, 0], sizes = [1, 4, 256], strides = [1, 1, 1]} : vector<2x4x256xf32> to vector<1x4x256xf32>
    %55 = vector.shape_cast %54 : vector<1x4x256xf32> to vector<4x256xf32>
    %56 = vector.extract_strided_slice %53 {offsets = [1, 0, 0], sizes = [1, 4, 256], strides = [1, 1, 1]} : vector<2x4x256xf32> to vector<1x4x256xf32>
    %57 = vector.shape_cast %56 : vector<1x4x256xf32> to vector<4x256xf32>
    %58 = tpu.concatenate %55, %57 in 1 : vector<4x256xf32>, vector<4x256xf32> -> vector<4x512xf32>
    %59 = vector.extract_strided_slice %10 {offsets = [0, 0, 145], sizes = [2, 4, 256], strides = [1, 1, 1]} : vector<2x4x512xf32> to vector<2x4x256xf32>
    %60 = vector.extract_strided_slice %59 {offsets = [0, 0, 0], sizes = [1, 4, 256], strides = [1, 1, 1]} : vector<2x4x256xf32> to vector<1x4x256xf32>
    %61 = vector.shape_cast %60 : vector<1x4x256xf32> to vector<4x256xf32>
    %62 = vector.extract_strided_slice %59 {offsets = [1, 0, 0], sizes = [1, 4, 256], strides = [1, 1, 1]} : vector<2x4x256xf32> to vector<1x4x256xf32>
    %63 = vector.shape_cast %62 : vector<1x4x256xf32> to vector<4x256xf32>
    %64 = tpu.concatenate %61, %63 in 1 : vector<4x256xf32>, vector<4x256xf32> -> vector<4x512xf32>
    %65 = tpu.concatenate %16, %22, %28, %34, %40, %46, %52, %58, %64 in 0 : vector<4x512xf32>, vector<4x512xf32>, vector<4x512xf32>, vector<4x512xf32>, vector<4x512xf32>, vector<4x512xf32>, vector<4x512xf32>, vector<4x512xf32>, vector<4x512xf32> -> vector<36x512xf32>
    %c0_6 = arith.constant 0 : index
    %c0_7 = arith.constant 0 : index
    %66 = vector.load %arg2[%c0_6, %c0_7] : memref<8x36xf32, #tpu.memory_space<vmem>>, vector<8x36xf32>
    %cst_8 = arith.constant dense<0.000000e+00> : vector<8x512xf32>
    %67 = tpu.matmul %66, %65, %cst_8 {dimension_numbers = #tpu.dot_dimension_numbers<[1], [0], [0], [1], [0, 0, 1, 1], [], []>} : vector<8x36xf32>, vector<36x512xf32>, vector<8x512xf32> -> vector<8x512xf32>
    %c0_9 = arith.constant 0 : index
    %c0_10 = arith.constant 0 : index
    %68 = vector.load %arg3[%c0_9, %c0_10] : memref<8x1xf32, #tpu.memory_space<vmem>>, vector<8x1xf32>
    %69 = vector.broadcast %68 : vector<8x1xf32> to vector<8x512xf32>
    %70 = arith.addf %67, %69 : vector<8x512xf32>
    %cst_11 = arith.constant 0.000000e+00 : f32
    %71 = vector.broadcast %cst_11 : f32 to vector<8x512xf32>
    %72 = arith.maximumf %70, %71 : vector<8x512xf32>
    %73 = vector.extract_strided_slice %72 {offsets = [0, 0], sizes = [8, 256], strides = [1, 1]} : vector<8x512xf32> to vector<8x256xf32>
    %c0_12 = arith.constant 0 : index
    %c0_13 = arith.constant 0 : index
    %c0_14 = arith.constant 0 : index
    %74 = vector.load %arg6[%c0_12, %c0_13, %c0_14] : memref<2x8x256xf32, #tpu.memory_space<vmem>>, vector<1x8x256xf32>
    %75 = vector.shape_cast %74 : vector<1x8x256xf32> to vector<8x256xf32>
    %76 = vector.shape_cast %73 : vector<8x256xf32> to vector<1x8x256xf32>
    tpu.vector_store %arg6[%c0_12, %c0_13, %c0_14], %76 {strides = array<i32>} : memref<2x8x256xf32, #tpu.memory_space<vmem>>, vector<1x8x256xf32>,
    %77 = vector.extract_strided_slice %72 {offsets = [0, 256], sizes = [8, 256], strides = [1, 1]} : vector<8x512xf32> to vector<8x256xf32>
    %c1 = arith.constant 1 : index
    %c0_15 = arith.constant 0 : index
    %c0_16 = arith.constant 0 : index
    %78 = vector.load %arg6[%c1, %c0_15, %c0_16] : memref<2x8x256xf32, #tpu.memory_space<vmem>>, vector<1x8x256xf32>
    %79 = vector.shape_cast %78 : vector<1x8x256xf32> to vector<8x256xf32>
    %80 = vector.shape_cast %77 : vector<8x256xf32> to vector<1x8x256xf32>
    tpu.vector_store %arg6[%c1, %c0_15, %c0_16], %80 {strides = array<i32>} : memref<2x8x256xf32, #tpu.memory_space<vmem>>, vector<1x8x256xf32>,
    return
  }
  func.func @transform_0(%arg0: i32) -> (i32, i32, i32) {
    %c0_i32 = arith.constant 0 : i32
    %c0_i32_0 = arith.constant 0 : i32
    %c0_i32_1 = arith.constant 0 : i32
    return %arg0, %c0_i32, %c0_i32_0 : i32, i32, i32
  }
  func.func @transform_1(%arg0: i32) -> (i32, i32) {
    %c0_i32 = arith.constant 0 : i32
    %c0_i32_0 = arith.constant 0 : i32
    %c0_i32_1 = arith.constant 0 : i32
    return %c0_i32, %c0_i32_0 : i32, i32
  }
  func.func @transform_2(%arg0: i32) -> (i32, i32) {
    %c0_i32 = arith.constant 0 : i32
    %c0_i32_0 = arith.constant 0 : i32
    %c0_i32_1 = arith.constant 0 : i32
    return %c0_i32, %c0_i32_0 : i32, i32
  }
  func.func @transform_3(%arg0: i32) -> (i32, i32) {
    %c0_i32 = arith.constant 0 : i32
    %c0_i32_0 = arith.constant 0 : i32
    %c0_i32_1 = arith.constant 0 : i32
    return %c0_i32, %c0_i32_0 : i32, i32
  }
  func.func @transform_4(%arg0: i32) -> (i32, i32) {
    %c0_i32 = arith.constant 0 : i32
    %c0_i32_0 = arith.constant 0 : i32
    %c0_i32_1 = arith.constant 0 : i32
    return %c0_i32, %c0_i32_0 : i32, i32
  }
  func.func @transform_5(%arg0: i32) -> (i32, i32, i32) {
    %c0_i32 = arith.constant 0 : i32
    %c0_i32_0 = arith.constant 0 : i32
    %c0_i32_1 = arith.constant 0 : i32
    return %arg0, %c0_i32, %c0_i32_0 : i32, i32, i32
  }
}

</mosaic_0001>

<llo_original>
// kernel: tpu_custom_call.1
$region0: #{tpu_custom_call.1}
  #allocation0 [shape = 'u32[]', space=smem, size = 0x4, offset = 0x4, fixed_abs, tag = 'smem constant byte address 0x4 - core index']
  #allocation1 [shape = 'u32[144,128]{1,0:T(1,128)}', space=vmem, size = 0x12000, scoped, tag = 'internal scratch']
  %s0 = inlined_call_operand.hbm [shape: f32[2,4,256], index: 0, kind: input, shape index: {}]
  %s1 = inlined_call_operand.vmem [shape: f32[8,36], index: 1, kind: input, shape index: {}]
  %s2 = inlined_call_operand.vmem [shape: f32[8,1], index: 2, kind: input, shape index: {}]
  %s3 = inlined_call_operand.vmem [shape: f32[1,512], index: 3, kind: input, shape index: {}]
  %s4 = inlined_call_operand.vmem [shape: f32[1,512], index: 4, kind: input, shape index: {}]
  %s5 = inlined_call_operand.hbm [shape: f32[2,8,256], index: 5, kind: output, shape index: {}]
  %s6 = sld [smem:[#allocation0]]
  $region34: #{tpu_custom_call.1} parent=0
    _
  %s8 = ssub.s32 1, %s6
  %s9 = scalar_select 0, %s8, %s6
  $region1: #{tpu_custom_call.1} parent=0
    #allocation2 [shape = 'u8[8192]{0}', space=vmem, size = 0x2000, scoped, tag = 'input window, operand 0, single buffered']
    #allocation3 [shape = 's32[1]{0}', space=sflag, size = 0x4, scoped, tag = 'scoped memory for tpu_custom_call.1']
    #allocation4 [shape = 's32[1]{0}', space=sflag, size = 0x4, scoped, tag = 'scoped memory for tpu_custom_call.1']
    #allocation5 [shape = 'u8[16384]{0}', space=vmem, size = 0x4000, scoped, tag = 'output window, operand 0, single buffered']
    %10 = vsyncpa [#allocation3], 0
    %11 = vsyncpa [#allocation4], 0
    // Predicated region
    $region2: #{tpu_custom_call.1} parent=1 // pred_check
      _
    $region3: #{tpu_custom_call.1} parent=1 // pred_check_branch
      %13 = sbr.rel (0) target = $region5
    $region4: #{tpu_custom_call.1} parent=1 // pred_region
      %s15 = ssub.s32 256, 256
      %16 = vsyncadd [#allocation3], %s15
      %s17 = sshll.u32 [#allocation2], 4
      %s18 = int_to_ptr.vmem [resolvable:$true] %s17
      %23 = dma.hbm_to_vmem [thread:$0]  %s0, 256, %s18, [#allocation3], 128, 128, 8
    $region5: #{tpu_custom_call.1} parent=1 // pred_fallthru
      _
    // Predicated region
    $region6: #{tpu_custom_call.1} parent=1 // pred_check
      _
    $region7: #{tpu_custom_call.1} parent=1 // pred_check_branch
      %25 = sbr.rel (0) target = $region9
    $region8: #{tpu_custom_call.1} parent=1 // pred_region
      _
    $region9: #{tpu_custom_call.1} parent=1 // pred_fallthru
      _
    // Predicated region
    $region10: #{tpu_custom_call.1} parent=1 // pred_check
      _
    $region11: #{tpu_custom_call.1} parent=1 // pred_check_branch
      %27 = sbr.rel (0) target = $region13
    $region12: #{tpu_custom_call.1} parent=1 // pred_region
      _
    $region13: #{tpu_custom_call.1} parent=1 // pred_fallthru
      _
    // Predicated region
    $region14: #{tpu_custom_call.1} parent=1 // pred_check
      _
    $region15: #{tpu_custom_call.1} parent=1 // pred_check_branch
      %29 = sbr.rel (0) target = $region17
    $region16: #{tpu_custom_call.1} parent=1 // pred_region
      _
    $region17: #{tpu_custom_call.1} parent=1 // pred_fallthru
      _
    // Predicated region
    $region18: #{tpu_custom_call.1} parent=1 // pred_check
      _
    $region19: #{tpu_custom_call.1} parent=1 // pred_check_branch
      %31 = sbr.rel (0) target = $region21
    $region20: #{tpu_custom_call.1} parent=1 // pred_region
      _
    $region21: #{tpu_custom_call.1} parent=1 // pred_fallthru
      _
    // Predicated region
    $region22: #{tpu_custom_call.1} parent=1 // pred_check
      _
    $region23: #{tpu_custom_call.1} parent=1 // pred_check_branch
      %33 = sbr.rel (0) target = $region25
    $region24: #{tpu_custom_call.1} parent=1 // pred_region
      %34 = dma.done [#allocation3], 256
    $region25: #{tpu_custom_call.1} parent=1 // pred_fallthru
      _
    %v35 = vld [vmem:[#allocation2] sm:$0xff]
    %v36 = vld [vmem:[#allocation2 + $0x8] sm:$0xff]
    %v39 = vcombine.high %v35, %v35
    %v40 = vcombine.high %v36, %v36
    %v43 = vld [vmem:[%s3] sm:$0xf]
    %v45 = vlaneseq
    %v46 = vshrl.u32 %v45, 7
    %v47 = vsub.s32 0, %v46
    %v48 = vrot.slane %v43, %v47
    %v49 = vlaneseq
    %v50 = vshrl.u32 %v49, 7
    %v51 = vsub.s32 1, %v50
    %v52 = vrot.slane %v43, %v51
    %v53 = vlaneseq
    %v54 = vshrl.u32 %v53, 7
    %v55 = vsub.s32 2, %v54
    %v56 = vrot.slane %v43, %v55
    %v57 = vlaneseq
    %v58 = vshrl.u32 %v57, 7
    %v59 = vsub.s32 3, %v58
    %v60 = vrot.slane %v43, %v59
    %v65 = vmul.f32 %v48, 0.0
    %v66 = vmul.f32 %v35, %v52
    %v67 = vmul.f32 %v39, %v56
    %v68 = vmul.f32 %v60, 0.0
    %v69 = vmul.f32 %v36, %v52
    %v70 = vmul.f32 %v40, %v56
    %v71 = vld [vmem:[%s4] sm:$0xf]
    %v73 = vlaneseq
    %v74 = vshrl.u32 %v73, 7
    %v75 = vsub.s32 0, %v74
    %v76 = vrot.slane %v71, %v75
    %v77 = vlaneseq
    %v78 = vshrl.u32 %v77, 7
    %v79 = vsub.s32 1, %v78
    %v80 = vrot.slane %v71, %v79
    %v81 = vlaneseq
    %v82 = vshrl.u32 %v81, 7
    %v83 = vsub.s32 2, %v82
    %v84 = vrot.slane %v71, %v83
    %v85 = vlaneseq
    %v86 = vshrl.u32 %v85, 7
    %v87 = vsub.s32 3, %v86
    %v88 = vrot.slane %v71, %v87
    %v93 = vmul.f32 %v76, 0.0
    %v94 = vmul.f32 %v35, %v80
    %v95 = vmul.f32 %v39, %v84
    %v96 = vmul.f32 %v88, 0.0
    %v97 = vmul.f32 %v36, %v80
    %v98 = vmul.f32 %v40, %v84
    %102 = vrot.lane.b32.xlu0 %v65, 17
    %v103 = vpop.permute.xlu0 %102
    %104 = vrot.lane.b32.xlu0 %v66, 17
    %v105 = vpop.permute.xlu0 %104
    %106 = vrot.lane.b32.xlu0 %v67, 17
    %v107 = vpop.permute.xlu0 %106
    %vm108 = vcmask 138240
    %v109 = vsel %vm108, %v103, %v105
    %v110 = vsel %vm108, %v105, %v107
    %115 = vrot.lane.b32.xlu0 %v69, 17
    %v116 = vpop.permute.xlu0 %115
    %117 = vrot.lane.b32.xlu0 %v70, 17
    %v118 = vpop.permute.xlu0 %117
    %v119 = vsel %vm108, %v103, %v116
    %v120 = vsel %vm108, %v116, %v118
    %124 = vrot.lane.b32.xlu0 0.0, 16
    %v125 = vpop.permute.xlu0 %124
    %126 = vrot.lane.b32.xlu0 %v35, 16
    %v127 = vpop.permute.xlu0 %126
    %128 = vrot.lane.b32.xlu0 %v39, 16
    %v129 = vpop.permute.xlu0 %128
    %vm130 = vcmask 130048
    %v131 = vsel %vm130, %v125, %v127
    %v132 = vsel %vm130, %v127, %v129
    %133 = vrot.lane.b32.xlu0 %v36, 16
    %v134 = vpop.permute.xlu0 %133
    %135 = vrot.lane.b32.xlu0 %v40, 16
    %v136 = vpop.permute.xlu0 %135
    %v137 = vsel %vm130, %v125, %v134
    %v138 = vsel %vm130, %v134, %v136
    %142 = vrot.lane.b32.xlu0 %v93, 15
    %v143 = vpop.permute.xlu0 %142
    %144 = vrot.lane.b32.xlu0 %v94, 15
    %v145 = vpop.permute.xlu0 %144
    %146 = vrot.lane.b32.xlu0 %v95, 15
    %v147 = vpop.permute.xlu0 %146
    %vm148 = vcmask 121856
    %v149 = vsel %vm148, %v143, %v145
    %v150 = vsel %vm148, %v145, %v147
    %155 = vrot.lane.b32.xlu0 %v97, 15
    %v156 = vpop.permute.xlu0 %155
    %157 = vrot.lane.b32.xlu0 %v98, 15
    %v158 = vpop.permute.xlu0 %157
    %v159 = vsel %vm148, %v143, %v156
    %v160 = vsel %vm148, %v156, %v158
    %163 = vrot.lane.b32.xlu0 %v65, 1
    %v164 = vpop.permute.xlu0 %163
    %165 = vrot.lane.b32.xlu0 %v66, 1
    %v166 = vpop.permute.xlu0 %165
    %167 = vrot.lane.b32.xlu0 %v67, 1
    %v168 = vpop.permute.xlu0 %167
    %vm169 = vcmask 7168
    %v170 = vsel %vm169, %v164, %v166
    %v171 = vsel %vm169, %v166, %v168
    %172 = vrot.lane.b32.xlu0 %v69, 1
    %v173 = vpop.permute.xlu0 %172
    %174 = vrot.lane.b32.xlu0 %v70, 1
    %v175 = vpop.permute.xlu0 %174
    %v176 = vsel %vm169, %v164, %v173
    %v177 = vsel %vm169, %v173, %v175
    %179 = vrot.lane.b32.xlu0 %v94, 127
    %v180 = vpop.permute.xlu0 %179
    %181 = vrot.lane.b32.xlu0 %v95, 127
    %v182 = vpop.permute.xlu0 %181
    %183 = vrot.lane.b32.xlu0 %v96, 127
    %v184 = vpop.permute.xlu0 %183
    %vm185 = vcmask 1039360
    %v186 = vsel %vm185, %v180, %v182
    %v187 = vsel %vm185, %v182, %v184
    %188 = vrot.lane.b32.xlu0 %v97, 127
    %v189 = vpop.permute.xlu0 %188
    %190 = vrot.lane.b32.xlu0 %v98, 127
    %v191 = vpop.permute.xlu0 %190
    %v192 = vsel %vm185, %v189, %v191
    %v193 = vsel %vm185, %v191, %v184
    %195 = vrot.lane.b32.xlu0 %v66, 113
    %v196 = vpop.permute.xlu0 %195
    %197 = vrot.lane.b32.xlu0 %v67, 113
    %v198 = vpop.permute.xlu0 %197
    %199 = vrot.lane.b32.xlu0 %v68, 113
    %v200 = vpop.permute.xlu0 %199
    %vm201 = vcmask 924672
    %v202 = vsel %vm201, %v196, %v198
    %v203 = vsel %vm201, %v198, %v200
    %206 = vrot.lane.b32.xlu0 %v69, 113
    %v207 = vpop.permute.xlu0 %206
    %208 = vrot.lane.b32.xlu0 %v70, 113
    %v209 = vpop.permute.xlu0 %208
    %v210 = vsel %vm201, %v207, %v209
    %v211 = vsel %vm201, %v209, %v200
    %214 = vrot.lane.b32.xlu0 %v35, 112
    %v215 = vpop.permute.xlu0 %214
    %216 = vrot.lane.b32.xlu0 %v39, 112
    %v217 = vpop.permute.xlu0 %216
    %218 = vrot.lane.b32.xlu0 0.0, 112
    %v219 = vpop.permute.xlu0 %218
    %vm220 = vcmask 916480
    %v221 = vsel %vm220, %v215, %v217
    %v222 = vsel %vm220, %v217, %v219
    %223 = vrot.lane.b32.xlu0 %v36, 112
    %v224 = vpop.permute.xlu0 %223
    %225 = vrot.lane.b32.xlu0 %v40, 112
    %v226 = vpop.permute.xlu0 %225
    %v227 = vsel %vm220, %v224, %v226
    %v228 = vsel %vm220, %v226, %v219
    %229 = vrot.lane.b32.xlu0 %v94, 111
    %v230 = vpop.permute.xlu0 %229
    %231 = vrot.lane.b32.xlu0 %v95, 111
    %v232 = vpop.permute.xlu0 %231
    %233 = vrot.lane.b32.xlu0 %v96, 111
    %v234 = vpop.permute.xlu0 %233
    %vm235 = vcmask 908288
    %v236 = vsel %vm235, %v230, %v232
    %v237 = vsel %vm235, %v232, %v234
    %238 = vrot.lane.b32.xlu0 %v97, 111
    %v239 = vpop.permute.xlu0 %238
    %240 = vrot.lane.b32.xlu0 %v98, 111
    %v241 = vpop.permute.xlu0 %240
    %v242 = vsel %vm235, %v239, %v241
    %v243 = vsel %vm235, %v241, %v234
    %v244 = vrot.slane %v131, 4
    %v245 = vrot.slane %v132, 4
    %v246 = vrot.slane %v137, 4
    %v247 = vrot.slane %v138, 4
    %v252 = vrot.slane %v170, 4
    %v253 = vrot.slane %v171, 4
    %v254 = vrot.slane %v176, 4
    %v255 = vrot.slane %v177, 4
    %v260 = vrot.slane %v186, 4
    %v261 = vrot.slane %v187, 4
    %v262 = vrot.slane %v192, 4
    %v263 = vrot.slane %v193, 4
    %v268 = vrot.slane %v221, 4
    %v269 = vrot.slane %v222, 4
    %v270 = vrot.slane %v227, 4
    %v271 = vrot.slane %v228, 4
    %vm276 = vcmask 1043456
    %v277 = vsel %vm276, %v109, %v244
    %v278 = vsel %vm276, %v110, %v245
    %v279 = vsel %vm276, %v119, %v246
    %v280 = vsel %vm276, %v120, %v247
    %v281 = vsel %vm276, %v149, %v252
    %v282 = vsel %vm276, %v150, %v253
    %v283 = vsel %vm276, %v159, %v254
    %v284 = vsel %vm276, %v160, %v255
    %v285 = vsel %vm276, %v35, %v260
    %v286 = vsel %vm276, %v39, %v261
    %v287 = vsel %vm276, %v36, %v262
    %v288 = vsel %vm276, %v40, %v263
    %v289 = vsel %vm276, %v202, %v268
    %v290 = vsel %vm276, %v203, %v269
    %v291 = vsel %vm276, %v210, %v270
    %v292 = vsel %vm276, %v211, %v271
    %v293 = vld [vmem:[%s1] sm:$0xff]
    %v294 = vld [vmem:[%s2] sm:$0xff]
    %296 = vset.pattern.permute.xlu0 0
    %297 = vperm.xlu0 %296, %v294
    %v298 = vpop.permute.xlu0 %297
    %vm300 = vcmask 293888
    %v302 = vsel %vm300, %v293, 0
    %v304 = vsel %vm276, %v236, 0
    %v306 = vsel %vm276, %v237, 0
    %v308 = vsel %vm276, %v242, 0
    %v310 = vsel %vm276, %v243, 0
    %312 = vmatprep.subr.mxu0 %v278
    %313 = vmatpush1.msra.mxu0 %v277
    %314 = vmatprep.subr.mxu0 %v282
    %315 = vmatpush1.msra.mxu0 %v281
    %316 = vmatprep.subr.mxu0 %v286
    %317 = vmatpush1.msra.mxu0 %v285
    %318 = vmatprep.subr.mxu0 %v290
    %319 = vmatpush1.msra.mxu0 %v289
    %320 = vmatprep.subr.mxu0 %v306
    %321 = vmatpush1.msra.mxu0 %v304
    %322 = vmatprep.subr.mxu0 0.0
    %323 = vmatpush1.msra.mxu0 0.0
    %324 = vmatprep.subr.mxu0 0.0
    %325 = vmatpush1.msra.mxu0 0.0
    %326 = vmatprep.subr.mxu0 0.0
    %327 = vmatpush1.msra.mxu0 0.0
    %328 = vmatprep.subr.mxu0 0.0
    %329 = vmatpush1.msra.mxu0 0.0
    %330 = vmatprep.subr.mxu0 0.0
    %331 = vmatpush1.msra.mxu0 0.0
    %332 = vmatprep.subr.mxu0 0.0
    %333 = vmatpush1.msra.mxu0 0.0
    %334 = vmatprep.subr.mxu0 0.0
    %335 = vmatpush1.msra.mxu0 0.0
    %336 = vmatprep.subr.mxu0 0.0
    %337 = vmatpush1.msra.mxu0 0.0
    %338 = vmatprep.subr.mxu0 0.0
    %339 = vmatpush1.msra.mxu0 0.0
    %340 = vmatprep.subr.mxu0 0.0
    %341 = vmatpush1.msra.mxu0 0.0
    %342 = vmatprep.subr.mxu0 0.0
    %343 = vmatpush1.msra.mxu0 0.0
    %344 = vmatprep.subr.mxu0 0.0
    %345 = vmatpush1.msra.mxu0 0.0
    %346 = vmatprep.subr.mxu0 0.0
    %347 = vmatpush1.msra.mxu0 0.0
    %348 = vmatprep.subr.mxu0 0.0
    %349 = vmatpush1.msra.mxu0 0.0
    %350 = vmatprep.subr.mxu0 0.0
    %351 = vmatpush1.msra.mxu0 0.0
    %352 = vmatprep.subr.mxu0 0.0
    %353 = vmatpush1.msra.mxu0 0.0
    %354 = vmatprep.subr.mxu0 0.0
    %355 = vmatpush1.msra.mxu0 0.0
    %356 = vmatprep.subr.mxu0 0.0
    %357 = vmatpush1.msra.mxu0 0.0
    %358 = vmatprep.subr.mxu0 0.0
    %359 = vmatpush1.msra.mxu0 0.0
    %360 = vmatprep.subr.mxu0 0.0
    %361 = vmatpush1.msra.mxu0 0.0
    %362 = vmatprep.subr.mxu0 0.0
    %363 = vmatpush1.msra.mxu0 0.0
    %364 = vmatprep.subr.mxu0 0.0
    %365 = vmatpush1.msra.mxu0 0.0
    %366 = vmatprep.subr.mxu0 0.0
    %367 = vmatpush1.msra.mxu0 0.0
    %368 = vmatprep.subr.mxu0 0.0
    %369 = vmatpush1.msra.mxu0 0.0
    %370 = vmatprep.subr.mxu0 0.0
    %371 = vmatpush1.msra.mxu0 0.0
    %372 = vmatprep.subr.mxu0 0.0
    %373 = vmatpush1.msra.mxu0 0.0
    %374 = vmatprep.subr.mxu0 0.0
    %375 = vmatpush1.msra.mxu0 0.0
    %376 = vmatprep.mubr.f32.mxu0 0.0
    %377 = vmatmul.mubr.f32.gmra.mrb[0].mxu0 %v302
    %v378 = vpop.f32.mrb[0].mxu0
    %v379 = vadd.f32 %v298, %v378
    %v380 = vpop.f32.mrb[0].mxu0
    %v381 = vadd.f32 %v298, %v380
    %382 = vdwg.mxu0
    %383 = vmatprep.subr.mxu0 %v280
    %384 = vmatpush1.msra.mxu0 %v279
    %385 = vmatprep.subr.mxu0 %v284
    %386 = vmatpush1.msra.mxu0 %v283
    %387 = vmatprep.subr.mxu0 %v288
    %388 = vmatpush1.msra.mxu0 %v287
    %389 = vmatprep.subr.mxu0 %v292
    %390 = vmatpush1.msra.mxu0 %v291
    %391 = vmatprep.subr.mxu0 %v310
    %392 = vmatpush1.msra.mxu0 %v308
    %393 = vmatprep.subr.mxu0 0.0
    %394 = vmatpush1.msra.mxu0 0.0
    %395 = vmatprep.subr.mxu0 0.0
    %396 = vmatpush1.msra.mxu0 0.0
    %397 = vmatprep.subr.mxu0 0.0
    %398 = vmatpush1.msra.mxu0 0.0
    %399 = vmatprep.subr.mxu0 0.0
    %400 = vmatpush1.msra.mxu0 0.0
    %401 = vmatprep.subr.mxu0 0.0
    %402 = vmatpush1.msra.mxu0 0.0
    %403 = vmatprep.subr.mxu0 0.0
    %404 = vmatpush1.msra.mxu0 0.0
    %405 = vmatprep.subr.mxu0 0.0
    %406 = vmatpush1.msra.mxu0 0.0
    %407 = vmatprep.subr.mxu0 0.0
    %408 = vmatpush1.msra.mxu0 0.0
    %409 = vmatprep.subr.mxu0 0.0
    %410 = vmatpush1.msra.mxu0 0.0
    %411 = vmatprep.subr.mxu0 0.0
    %412 = vmatpush1.msra.mxu0 0.0
    %413 = vmatprep.subr.mxu0 0.0
    %414 = vmatpush1.msra.mxu0 0.0
    %415 = vmatprep.subr.mxu0 0.0
    %416 = vmatpush1.msra.mxu0 0.0
    %417 = vmatprep.subr.mxu0 0.0
    %418 = vmatpush1.msra.mxu0 0.0
    %419 = vmatprep.subr.mxu0 0.0
    %420 = vmatpush1.msra.mxu0 0.0
    %421 = vmatprep.subr.mxu0 0.0
    %422 = vmatpush1.msra.mxu0 0.0
    %423 = vmatprep.subr.mxu0 0.0
    %424 = vmatpush1.msra.mxu0 0.0
    %425 = vmatprep.subr.mxu0 0.0
    %426 = vmatpush1.msra.mxu0 0.0
    %427 = vmatprep.subr.mxu0 0.0
    %428 = vmatpush1.msra.mxu0 0.0
    %429 = vmatprep.subr.mxu0 0.0
    %430 = vmatpush1.msra.mxu0 0.0
    %431 = vmatprep.subr.mxu0 0.0
    %432 = vmatpush1.msra.mxu0 0.0
    %433 = vmatprep.subr.mxu0 0.0
    %434 = vmatpush1.msra.mxu0 0.0
    %435 = vmatprep.subr.mxu0 0.0
    %436 = vmatpush1.msra.mxu0 0.0
    %437 = vmatprep.subr.mxu0 0.0
    %438 = vmatpush1.msra.mxu0 0.0
    %439 = vmatprep.subr.mxu0 0.0
    %440 = vmatpush1.msra.mxu0 0.0
    %441 = vmatprep.subr.mxu0 0.0
    %442 = vmatpush1.msra.mxu0 0.0
    %443 = vmatprep.subr.mxu0 0.0
    %444 = vmatpush1.msra.mxu0 0.0
    %445 = vmatprep.subr.mxu0 0.0
    %446 = vmatpush1.msra.mxu0 0.0
    %447 = vmatprep.mubr.f32.mxu0 0.0
    %448 = vmatmul.mubr.f32.gmra.mrb[0].mxu0 %v302
    %v449 = vpop.f32.mrb[0].mxu0
    %v450 = vadd.f32 %v298, %v449
    %v451 = vpop.f32.mrb[0].mxu0
    %v452 = vadd.f32 %v298, %v451
    %453 = vdwg.mxu0
    %v454 = vmax.f32 %v379, 0.0
    %v455 = vmax.f32 %v381, 0.0
    %v456 = vmax.f32 %v450, 0.0
    %v457 = vmax.f32 %v452, 0.0
    %458 = vst [vmem:[#allocation5] sm:$0xff] %v454
    %459 = vst [vmem:[#allocation5 + $0x8] sm:$0xff] %v455
    %s460 = scalar_lea.vmem [#allocation5], 16
    %461 = vst [vmem:[%s460] sm:$0xff] %v456
    %462 = vst [vmem:[%s460 + $0x8] sm:$0xff] %v457
    // Predicated region
    $region26: #{tpu_custom_call.1} parent=1 // pred_check
      _
    $region27: #{tpu_custom_call.1} parent=1 // pred_check_branch
      %464 = sbr.rel (0) target = $region29
    $region28: #{tpu_custom_call.1} parent=1 // pred_region
      %s466 = ssub.s32 512, 512
      %467 = vsyncadd [#allocation4], %s466
      %s468 = sshll.u32 [#allocation5], 4
      %s469 = int_to_ptr.vmem [resolvable:$true] %s468
      %474 = dma.vmem_to_hbm [thread:$0]  %s469, 512, %s5, [#allocation4], 256, 256, 16
    $region29: #{tpu_custom_call.1} parent=1 // pred_fallthru
      _
    // Predicated region
    $region30: #{tpu_custom_call.1} parent=1 // pred_check
      _
    $region31: #{tpu_custom_call.1} parent=1 // pred_check_branch
      %476 = sbr.rel (0) target = $region33
    $region32: #{tpu_custom_call.1} parent=1 // pred_region
      %477 = dma.done [#allocation4], 512
    $region33: #{tpu_custom_call.1} parent=1 // pred_fallthru
      _
    %478 = vsyncpa [#allocation3], 1
    %479 = vsyncpa [#allocation4], 1

</llo_original>
